<compile_context>
chip_gen: v6e
topology: v6e:2x2x1
jax: 0.10.0
libtpu: 0.0.40
codegen_flags: <defaults>
</compile_context>

<pallas_src>
import functools

import jax
import jax.numpy as jnp
from jax.experimental import pallas as pl
from jax.experimental.pallas import tpu as pltpu


def _layer_norm(y, g, b, eps):
    """LayerNorm over the last dim, mean-centered (two-pass) form, f32."""
    mu = jnp.mean(y, axis=-1, keepdims=True)
    c = y - mu
    var = jnp.mean(c * c, axis=-1, keepdims=True)
    return c * jax.lax.rsqrt(var + eps) * g + b


def _encoder_layer_kernel(x_ref, wqkv_ref, wfc_ref,
                          g1_ref, b1_ref, g2_ref, b2_ref,
                          out_ref, xn_ref, acc_ref, *, d_k, d_v, eps):
    h = pl.program_id(1)                 # head index (reduction axis)
    mm = wqkv_ref.dtype                  # MXU operand dtype (bfloat16)

    # ---- once per batch sample (head 0): shared LayerNorm1 + zero the fc acc ----
    @pl.when(h == 0)
    def _():
        xn_ref[...] = _layer_norm(x_ref[...], g1_ref[...], b1_ref[...], eps)
        acc_ref[...] = jnp.zeros_like(acc_ref)

    # ---- this head's fused q|k|v projection: ONE 2-D MXU matmul ----
    # wqkv_ref is (D, 2*d_k + d_v); the 1/sqrt(d_k) scale is pre-folded into the
    # q columns host-side.  f32 MXU accumulation; result is transient and per-head.
    qkv = jnp.dot(xn_ref[...].astype(mm), wqkv_ref[...],
                  preferred_element_type=jnp.float32)              # (L, 2dk+dv) f32
    # cast right where the slices feed the next MXU op
    q = qkv[:, :d_k].astype(mm)
    k = qkv[:, d_k:2 * d_k].astype(mm)
    v = qkv[:, 2 * d_k:].astype(mm)

    # ---- scaled dot-product attention for this head (f32 softmax) ----
    # contract the last dims of q and k (q @ k^T) without materializing k^T
    scores = jax.lax.dot_general(q, k, (((1,), (1,)), ((), ())),
                                 preferred_element_type=jnp.float32)   # (L, L)
    m = jnp.max(scores, axis=-1, keepdims=True)
    e = jnp.exp(scores - m)
    p = e * pl.reciprocal(jnp.sum(e, axis=-1, keepdims=True), approx=True)

    o_h = jnp.dot(p.astype(mm), v, preferred_element_type=jnp.float32)  # (L, d_v)

    # ---- this head's slice of the output projection, accumulated in f32 ----
    acc_ref[...] += jnp.dot(o_h.astype(mm), wfc_ref[...],
                            preferred_element_type=jnp.float32)         # (L, D)

    # ---- last head: residual + PositionwiseFeedForward4 (out = y1 + LN2(y1)) ----
    @pl.when(h == pl.num_programs(1) - 1)
    def _():
        y1 = x_ref[...] + acc_ref[...]          # residual is the ORIGINAL x
        out_ref[...] = y1 + _layer_norm(y1, g2_ref[...], b2_ref[...], eps)


def encoder_layer3(x, params, *, n_head, d_k, d_v, eps=1e-6, mm_dtype=jnp.bfloat16):
    """x: (B, L, D) float32.  params: dict of f32 weights (see init_params)."""
    B, L, D = x.shape
    H = n_head

    # --- host-side weight prep (free / constant-folded under jit) ---
    # fold 1/sqrt(d_k) into Wq, regroup per head, fuse q|k|v along the output dim
    wq = (params["w_qs"] * (d_k ** -0.5)).reshape(D, H, d_k).transpose(1, 0, 2)
    wk = params["w_ks"].reshape(D, H, d_k).transpose(1, 0, 2)
    wv = params["w_vs"].reshape(D, H, d_v).transpose(1, 0, 2)
    wqkv = jnp.concatenate([wq, wk, wv], axis=-1).astype(mm_dtype)   # (H, D, 2dk+dv)
    wfc = params["w_fc"].reshape(H, d_v, D).astype(mm_dtype)         # (H, dv, D)

    x2 = x.reshape(B * L, D)           # rows = (batch, seq) pairs, row-major

    kern = functools.partial(_encoder_layer_kernel, d_k=d_k, d_v=d_v, eps=eps)

    cost = pl.CostEstimate(
        flops=int(2 * B * L * D * H * (2 * d_k + d_v)      # q|k|v projection
                  + 2 * B * H * L * L * (d_k + d_v)        # qk^T and attn @ v
                  + 2 * B * L * H * d_v * D),              # output projection
        transcendentals=int(B * H * L * L),                # softmax exp
        bytes_accessed=int(4 * 2 * B * L * D               # x + out (f32)
                           + 2 * (wqkv.size + wfc.size)    # bf16 weights
                           + 4 * 4 * D),                   # LN params
    )

    out2 = pl.pallas_call(
        kern,
        out_shape=jax.ShapeDtypeStruct((B * L, D), jnp.float32),
        grid_spec=pltpu.PrefetchScalarGridSpec(
            num_scalar_prefetch=0,
            grid=(B, H),                              # batch parallel, heads reduce
            in_specs=[
                pl.BlockSpec((L, D), lambda b, h: (b, 0)),                  # x rows of sample b
                pl.BlockSpec((None, D, 2 * d_k + d_v), lambda b, h: (h, 0, 0)),  # this head's Wq|Wk|Wv
                pl.BlockSpec((None, d_v, D), lambda b, h: (h, 0, 0)),            # this head's Wfc slice
                pl.BlockSpec((1, D), lambda b, h: (0, 0)),                  # ln1 gamma
                pl.BlockSpec((1, D), lambda b, h: (0, 0)),                  # ln1 beta
                pl.BlockSpec((1, D), lambda b, h: (0, 0)),                  # ln2 gamma
                pl.BlockSpec((1, D), lambda b, h: (0, 0)),                  # ln2 beta
            ],
            # same out block revisited across h (accumulator pattern); written at h==H-1
            out_specs=pl.BlockSpec((L, D), lambda b, h: (b, 0)),
            scratch_shapes=[
                pltpu.VMEM((L, D), jnp.float32),   # xn = LayerNorm1(x), shared by heads
                pltpu.VMEM((L, D), jnp.float32),   # f32 accumulator for sum_h o_h @ Wfc_h
            ],
        ),
        compiler_params=pltpu.CompilerParams(
            dimension_semantics=("parallel", "arbitrary")),
        cost_estimate=cost,
    )(x2, wqkv, wfc,
      params["ln1_g"], params["ln1_b"], params["ln2_g"], params["ln2_b"])

    return out2.reshape(B, L, D)


def init_params(key, d_model, n_head, d_k, d_v):
    ks = jax.random.split(key, 6)
    scale = 0.05
    return {
        # stored as (in, out) so the kernel computes x @ W
        "w_qs": scale * jax.random.normal(ks[0], (d_model, n_head * d_k), jnp.float32),
        "w_ks": scale * jax.random.normal(ks[1], (d_model, n_head * d_k), jnp.float32),
        "w_vs": scale * jax.random.normal(ks[2], (d_model, n_head * d_v), jnp.float32),
        "w_fc": scale * jax.random.normal(ks[3], (n_head * d_v, d_model), jnp.float32),
        "ln1_g": jnp.ones((1, d_model), jnp.float32)
                 + 0.01 * jax.random.normal(ks[4], (1, d_model), jnp.float32),
        "ln1_b": jnp.zeros((1, d_model), jnp.float32),
        "ln2_g": jnp.ones((1, d_model), jnp.float32)
                 + 0.01 * jax.random.normal(ks[5], (1, d_model), jnp.float32),
        "ln2_b": jnp.zeros((1, d_model), jnp.float32),
    }


def encoder_layer3_ref(x, params, *, n_head, d_k, d_v, eps=1e-6):
    """Pure-JAX f32 reference mirroring the PyTorch forward (eval mode)."""
    B, L, D = x.shape

    def ln(y, g, b):
        mu = y.mean(-1, keepdims=True)
        var = ((y - mu) ** 2).mean(-1, keepdims=True)
        return (y - mu) / jnp.sqrt(var + eps) * g + b

    xn = ln(x, params["ln1_g"], params["ln1_b"])
    q = (xn @ params["w_qs"]).reshape(B, L, n_head, d_k).transpose(0, 2, 1, 3)
    k = (xn @ params["w_ks"]).reshape(B, L, n_head, d_k).transpose(0, 2, 1, 3)
    v = (xn @ params["w_vs"]).reshape(B, L, n_head, d_v).transpose(0, 2, 1, 3)
    attn = jax.nn.softmax((q / (d_k ** 0.5)) @ k.transpose(0, 1, 3, 2), axis=-1)
    o = (attn @ v).transpose(0, 2, 1, 3).reshape(B, L, n_head * d_v)
    y1 = x + o @ params["w_fc"]
    return y1 + ln(y1, params["ln2_g"], params["ln2_b"])


if __name__ == "__main__":
    # Small shapes: batch=2, seq=8, d_model=32, n_head=2, d_k=d_v=16
    # (d_inner is unused by this module's forward).
    B, L, d_model = 2, 8, 32
    n_head, d_k, d_v = 2, 16, 16

    key = jax.random.PRNGKey(0)
    kx, kp = jax.random.split(key)
    x = jax.random.normal(kx, (B, L, d_model), jnp.float32)
    params = init_params(kp, d_model, n_head, d_k, d_v)

    out = encoder_layer3(x, params, n_head=n_head, d_k=d_k, d_v=d_v)
    out = jax.block_until_ready(out)

    ref = encoder_layer3_ref(x, params, n_head=n_head, d_k=d_k, d_v=d_v)
    assert out.shape == (B, L, d_model)
    # bf16 MXU operands + approx (EUP) softmax reciprocal => slightly relaxed
    # tolerance vs the pure-f32 reference; structural bugs would be O(0.1-1).
    assert jnp.allclose(out, ref, atol=2e-2, rtol=2e-2), "mismatch vs reference"

    print("KERNEL_OK")
</pallas_src>

<mosaic_0001>
module attributes {stable_mosaic.version = 11 : i64} {
  func.func @_encoder_layer_kernel(%arg0: i32, %arg1: i32, %arg2: memref<8x32xf32, #tpu.memory_space<vmem>>, %arg3: memref<1x32x48xbf16, #tpu.memory_space<vmem>>, %arg4: memref<1x16x32xbf16, #tpu.memory_space<vmem>>, %arg5: memref<1x32xf32, #tpu.memory_space<vmem>>, %arg6: memref<1x32xf32, #tpu.memory_space<vmem>>, %arg7: memref<1x32xf32, #tpu.memory_space<vmem>>, %arg8: memref<1x32xf32, #tpu.memory_space<vmem>>, %arg9: memref<8x32xf32, #tpu.memory_space<vmem>>, %arg10: memref<8x32xf32, #tpu.memory_space<vmem>>, %arg11: memref<8x32xf32, #tpu.memory_space<vmem>>) attributes {dimension_semantics = [#tpu.dimension_semantics<parallel>, #tpu.dimension_semantics<arbitrary>], iteration_bounds = array<i64: 2, 2>, scalar_prefetch = 0 : i64, scratch_operands = 2 : i64, tpu.core_type = #tpu.core_type<tc>, window_params = [{transform_indices = @transform_0, window_bounds = array<i64: 8, 32>}, {transform_indices = @transform_1, window_bounds = array<i64: 1, 32, 48>}, {transform_indices = @transform_2, window_bounds = array<i64: 1, 16, 32>}, {pipeline_mode = #tpu.pipeline_mode<synchronous>, transform_indices = @transform_3, window_bounds = array<i64: 1, 32>}, {pipeline_mode = #tpu.pipeline_mode<synchronous>, transform_indices = @transform_4, window_bounds = array<i64: 1, 32>}, {pipeline_mode = #tpu.pipeline_mode<synchronous>, transform_indices = @transform_5, window_bounds = array<i64: 1, 32>}, {pipeline_mode = #tpu.pipeline_mode<synchronous>, transform_indices = @transform_6, window_bounds = array<i64: 1, 32>}, {transform_indices = @transform_7, window_bounds = array<i64: 8, 32>}]} {
    %c0_i32 = arith.constant 0 : i32
    %0 = arith.cmpi eq, %arg1, %c0_i32 : i32
    %1 = arith.extui %0 : i1 to i32
    %c0_i32_0 = arith.constant 0 : i32
    %2 = arith.cmpi ne, %1, %c0_i32_0 : i32
    scf.if %2 {
      %c0_18 = arith.constant 0 : index
      %c0_19 = arith.constant 0 : index
      %37 = vector.load %arg2[%c0_18, %c0_19] : memref<8x32xf32, #tpu.memory_space<vmem>>, vector<8x32xf32>
      %c0_20 = arith.constant 0 : index
      %c0_21 = arith.constant 0 : index
      %38 = vector.load %arg5[%c0_20, %c0_21] : memref<1x32xf32, #tpu.memory_space<vmem>>, vector<1x32xf32>
      %c0_22 = arith.constant 0 : index
      %c0_23 = arith.constant 0 : index
      %39 = vector.load %arg6[%c0_22, %c0_23] : memref<1x32xf32, #tpu.memory_space<vmem>>, vector<1x32xf32>
      %cst_24 = arith.constant dense<0.000000e+00> : vector<8xf32>
      %40 = vector.multi_reduction <add>, %37, %cst_24 [1] : vector<8x32xf32> to vector<8xf32>
      %41 = vector.shape_cast %40 : vector<8xf32> to vector<8x1xf32>
      %cst_25 = arith.constant 3.200000e+01 : f32
      %42 = vector.broadcast %cst_25 : f32 to vector<8x1xf32>
      %43 = arith.divf %41, %42 : vector<8x1xf32>
      %44 = vector.broadcast %43 : vector<8x1xf32> to vector<8x32xf32>
      %45 = arith.subf %37, %44 : vector<8x32xf32>
      %46 = arith.mulf %45, %45 : vector<8x32xf32>
      %cst_26 = arith.constant dense<0.000000e+00> : vector<8xf32>
      %47 = vector.multi_reduction <add>, %46, %cst_26 [1] : vector<8x32xf32> to vector<8xf32>
      %48 = vector.shape_cast %47 : vector<8xf32> to vector<8x1xf32>
      %cst_27 = arith.constant 3.200000e+01 : f32
      %49 = vector.broadcast %cst_27 : f32 to vector<8x1xf32>
      %50 = arith.divf %48, %49 : vector<8x1xf32>
      %cst_28 = arith.constant 9.99999997E-7 : f32
      %51 = vector.broadcast %cst_28 : f32 to vector<8x1xf32>
      %52 = arith.addf %50, %51 : vector<8x1xf32>
      %53 = math.rsqrt %52 : vector<8x1xf32>
      %54 = vector.broadcast %53 : vector<8x1xf32> to vector<8x32xf32>
      %55 = arith.mulf %45, %54 : vector<8x32xf32>
      %56 = vector.broadcast %38 : vector<1x32xf32> to vector<8x32xf32>
      %57 = arith.mulf %55, %56 : vector<8x32xf32>
      %58 = vector.broadcast %39 : vector<1x32xf32> to vector<8x32xf32>
      %59 = arith.addf %57, %58 : vector<8x32xf32>
      %c0_29 = arith.constant 0 : index
      %c0_30 = arith.constant 0 : index
      %60 = vector.load %arg10[%c0_29, %c0_30] : memref<8x32xf32, #tpu.memory_space<vmem>>, vector<8x32xf32>
      tpu.vector_store %arg10[%c0_29, %c0_30], %59 {strides = array<i32>} : memref<8x32xf32, #tpu.memory_space<vmem>>, vector<8x32xf32>,
      %cst_31 = arith.constant 0.000000e+00 : f32
      %61 = vector.broadcast %cst_31 : f32 to vector<8x32xf32>
      %c0_32 = arith.constant 0 : index
      %c0_33 = arith.constant 0 : index
      %62 = vector.load %arg11[%c0_32, %c0_33] : memref<8x32xf32, #tpu.memory_space<vmem>>, vector<8x32xf32>
      tpu.vector_store %arg11[%c0_32, %c0_33], %61 {strides = array<i32>} : memref<8x32xf32, #tpu.memory_space<vmem>>, vector<8x32xf32>,
    } else {
    }
    %c0 = arith.constant 0 : index
    %c0_1 = arith.constant 0 : index
    %3 = vector.load %arg10[%c0, %c0_1] : memref<8x32xf32, #tpu.memory_space<vmem>>, vector<8x32xf32>
    %4 = arith.truncf %3 : vector<8x32xf32> to vector<8x32xbf16>
    %c0_2 = arith.constant 0 : index
    %c0_3 = arith.constant 0 : index
    %c0_4 = arith.constant 0 : index
    %5 = vector.load %arg3[%c0_2, %c0_3, %c0_4] : memref<1x32x48xbf16, #tpu.memory_space<vmem>>, vector<1x32x48xbf16>
    %6 = vector.shape_cast %5 : vector<1x32x48xbf16> to vector<32x48xbf16>
    %cst = arith.constant dense<0.000000e+00> : vector<8x48xf32>
    %7 = tpu.matmul %4, %6, %cst {dimension_numbers = #tpu.dot_dimension_numbers<[1], [0], [0], [1], [0, 0, 1, 1], [], []>} : vector<8x32xbf16>, vector<32x48xbf16>, vector<8x48xf32> -> vector<8x48xf32>
    %8 = vector.extract_strided_slice %7 {offsets = [0, 0], sizes = [8, 16], strides = [1, 1]} : vector<8x48xf32> to vector<8x16xf32>
    %9 = arith.truncf %8 : vector<8x16xf32> to vector<8x16xbf16>
    %10 = vector.extract_strided_slice %7 {offsets = [0, 16], sizes = [8, 16], strides = [1, 1]} : vector<8x48xf32> to vector<8x16xf32>
    %11 = arith.truncf %10 : vector<8x16xf32> to vector<8x16xbf16>
    %12 = vector.extract_strided_slice %7 {offsets = [0, 32], sizes = [8, 16], strides = [1, 1]} : vector<8x48xf32> to vector<8x16xf32>
    %13 = arith.truncf %12 : vector<8x16xf32> to vector<8x16xbf16>
    %cst_5 = arith.constant dense<0.000000e+00> : vector<8x8xf32>
    %14 = tpu.matmul %9, %11, %cst_5 {dimension_numbers = #tpu.dot_dimension_numbers<[1], [1], [0], [0], [0, 0, 1, 0], [], []>} : vector<8x16xbf16>, vector<8x16xbf16>, vector<8x8xf32> -> vector<8x8xf32>
    %cst_6 = arith.constant dense<0xFF800000> : vector<8xf32>
    %15 = vector.multi_reduction <maximumf>, %14, %cst_6 [1] : vector<8x8xf32> to vector<8xf32>
    %16 = vector.shape_cast %15 : vector<8xf32> to vector<8x1xf32>
    %17 = vector.broadcast %16 : vector<8x1xf32> to vector<8x8xf32>
    %18 = arith.subf %14, %17 : vector<8x8xf32>
    %19 = math.exp %18 : vector<8x8xf32>
    %cst_7 = arith.constant dense<0.000000e+00> : vector<8xf32>
    %20 = vector.multi_reduction <add>, %19, %cst_7 [1] : vector<8x8xf32> to vector<8xf32>
    %21 = vector.shape_cast %20 : vector<8xf32> to vector<8x1xf32>
    %22 = tpu.reciprocal %21 {approx = true} : vector<8x1xf32> -> vector<8x1xf32>
    %23 = vector.broadcast %22 : vector<8x1xf32> to vector<8x8xf32>
    %24 = arith.mulf %19, %23 : vector<8x8xf32>
    %25 = arith.truncf %24 : vector<8x8xf32> to vector<8x8xbf16>
    %cst_8 = arith.constant dense<0.000000e+00> : vector<8x16xf32>
    %26 = tpu.matmul %25, %13, %cst_8 {dimension_numbers = #tpu.dot_dimension_numbers<[1], [0], [0], [1], [0, 0, 1, 1], [], []>} : vector<8x8xbf16>, vector<8x16xbf16>, vector<8x16xf32> -> vector<8x16xf32>
    %c0_9 = arith.constant 0 : index
    %c0_10 = arith.constant 0 : index
    %27 = vector.load %arg11[%c0_9, %c0_10] : memref<8x32xf32, #tpu.memory_space<vmem>>, vector<8x32xf32>
    %28 = arith.truncf %26 : vector<8x16xf32> to vector<8x16xbf16>
    %c0_11 = arith.constant 0 : index
    %c0_12 = arith.constant 0 : index
    %c0_13 = arith.constant 0 : index
    %29 = vector.load %arg4[%c0_11, %c0_12, %c0_13] : memref<1x16x32xbf16, #tpu.memory_space<vmem>>, vector<1x16x32xbf16>
    %30 = vector.shape_cast %29 : vector<1x16x32xbf16> to vector<16x32xbf16>
    %cst_14 = arith.constant dense<0.000000e+00> : vector<8x32xf32>
    %31 = tpu.matmul %28, %30, %cst_14 {dimension_numbers = #tpu.dot_dimension_numbers<[1], [0], [0], [1], [0, 0, 1, 1], [], []>} : vector<8x16xbf16>, vector<16x32xbf16>, vector<8x32xf32> -> vector<8x32xf32>
    %32 = arith.addf %27, %31 : vector<8x32xf32>
    %c0_15 = arith.constant 0 : index
    %c0_16 = arith.constant 0 : index
    %33 = vector.load %arg11[%c0_15, %c0_16] : memref<8x32xf32, #tpu.memory_space<vmem>>, vector<8x32xf32>
    tpu.vector_store %arg11[%c0_15, %c0_16], %32 {strides = array<i32>} : memref<8x32xf32, #tpu.memory_space<vmem>>, vector<8x32xf32>,
    %c1_i32 = arith.constant 1 : i32
    %34 = arith.cmpi eq, %arg1, %c1_i32 : i32
    %35 = arith.extui %34 : i1 to i32
    %c0_i32_17 = arith.constant 0 : i32
    %36 = arith.cmpi ne, %35, %c0_i32_17 : i32
    scf.if %36 {
      %c0_18 = arith.constant 0 : index
      %c0_19 = arith.constant 0 : index
      %37 = vector.load %arg2[%c0_18, %c0_19] : memref<8x32xf32, #tpu.memory_space<vmem>>, vector<8x32xf32>
      %c0_20 = arith.constant 0 : index
      %c0_21 = arith.constant 0 : index
      %38 = vector.load %arg11[%c0_20, %c0_21] : memref<8x32xf32, #tpu.memory_space<vmem>>, vector<8x32xf32>
      %39 = arith.addf %37, %38 : vector<8x32xf32>
      %c0_22 = arith.constant 0 : index
      %c0_23 = arith.constant 0 : index
      %40 = vector.load %arg7[%c0_22, %c0_23] : memref<1x32xf32, #tpu.memory_space<vmem>>, vector<1x32xf32>
      %c0_24 = arith.constant 0 : index
      %c0_25 = arith.constant 0 : index
      %41 = vector.load %arg8[%c0_24, %c0_25] : memref<1x32xf32, #tpu.memory_space<vmem>>, vector<1x32xf32>
      %cst_26 = arith.constant dense<0.000000e+00> : vector<8xf32>
      %42 = vector.multi_reduction <add>, %39, %cst_26 [1] : vector<8x32xf32> to vector<8xf32>
      %43 = vector.shape_cast %42 : vector<8xf32> to vector<8x1xf32>
      %cst_27 = arith.constant 3.200000e+01 : f32
      %44 = vector.broadcast %cst_27 : f32 to vector<8x1xf32>
      %45 = arith.divf %43, %44 : vector<8x1xf32>
      %46 = vector.broadcast %45 : vector<8x1xf32> to vector<8x32xf32>
      %47 = arith.subf %39, %46 : vector<8x32xf32>
      %48 = arith.mulf %47, %47 : vector<8x32xf32>
      %cst_28 = arith.constant dense<0.000000e+00> : vector<8xf32>
      %49 = vector.multi_reduction <add>, %48, %cst_28 [1] : vector<8x32xf32> to vector<8xf32>
      %50 = vector.shape_cast %49 : vector<8xf32> to vector<8x1xf32>
      %cst_29 = arith.constant 3.200000e+01 : f32
      %51 = vector.broadcast %cst_29 : f32 to vector<8x1xf32>
      %52 = arith.divf %50, %51 : vector<8x1xf32>
      %cst_30 = arith.constant 9.99999997E-7 : f32
      %53 = vector.broadcast %cst_30 : f32 to vector<8x1xf32>
      %54 = arith.addf %52, %53 : vector<8x1xf32>
      %55 = math.rsqrt %54 : vector<8x1xf32>
      %56 = vector.broadcast %55 : vector<8x1xf32> to vector<8x32xf32>
      %57 = arith.mulf %47, %56 : vector<8x32xf32>
      %58 = vector.broadcast %40 : vector<1x32xf32> to vector<8x32xf32>
      %59 = arith.mulf %57, %58 : vector<8x32xf32>
      %60 = vector.broadcast %41 : vector<1x32xf32> to vector<8x32xf32>
      %61 = arith.addf %59, %60 : vector<8x32xf32>
      %62 = arith.addf %39, %61 : vector<8x32xf32>
      %c0_31 = arith.constant 0 : index
      %c0_32 = arith.constant 0 : index
      %63 = vector.load %arg9[%c0_31, %c0_32] : memref<8x32xf32, #tpu.memory_space<vmem>>, vector<8x32xf32>
      tpu.vector_store %arg9[%c0_31, %c0_32], %62 {strides = array<i32>} : memref<8x32xf32, #tpu.memory_space<vmem>>, vector<8x32xf32>,
    } else {
    }
    return
  }
  func.func @transform_0(%arg0: i32, %arg1: i32) -> (i32, i32) {
    %c0_i32 = arith.constant 0 : i32
    %c0_i32_0 = arith.constant 0 : i32
    return %arg0, %c0_i32 : i32, i32
  }
  func.func @transform_1(%arg0: i32, %arg1: i32) -> (i32, i32, i32) {
    %c0_i32 = arith.constant 0 : i32
    %c0_i32_0 = arith.constant 0 : i32
    %c0_i32_1 = arith.constant 0 : i32
    return %arg1, %c0_i32, %c0_i32_0 : i32, i32, i32
  }
  func.func @transform_2(%arg0: i32, %arg1: i32) -> (i32, i32, i32) {
    %c0_i32 = arith.constant 0 : i32
    %c0_i32_0 = arith.constant 0 : i32
    %c0_i32_1 = arith.constant 0 : i32
    return %arg1, %c0_i32, %c0_i32_0 : i32, i32, i32
  }
  func.func @transform_3(%arg0: i32, %arg1: i32) -> (i32, i32) {
    %c0_i32 = arith.constant 0 : i32
    %c0_i32_0 = arith.constant 0 : i32
    %c0_i32_1 = arith.constant 0 : i32
    return %c0_i32, %c0_i32_0 : i32, i32
  }
  func.func @transform_4(%arg0: i32, %arg1: i32) -> (i32, i32) {
    %c0_i32 = arith.constant 0 : i32
    %c0_i32_0 = arith.constant 0 : i32
    %c0_i32_1 = arith.constant 0 : i32
    return %c0_i32, %c0_i32_0 : i32, i32
  }
  func.func @transform_5(%arg0: i32, %arg1: i32) -> (i32, i32) {
    %c0_i32 = arith.constant 0 : i32
    %c0_i32_0 = arith.constant 0 : i32
    %c0_i32_1 = arith.constant 0 : i32
    return %c0_i32, %c0_i32_0 : i32, i32
  }
  func.func @transform_6(%arg0: i32, %arg1: i32) -> (i32, i32) {
    %c0_i32 = arith.constant 0 : i32
    %c0_i32_0 = arith.constant 0 : i32
    %c0_i32_1 = arith.constant 0 : i32
    return %c0_i32, %c0_i32_0 : i32, i32
  }
  func.func @transform_7(%arg0: i32, %arg1: i32) -> (i32, i32) {
    %c0_i32 = arith.constant 0 : i32
    %c0_i32_0 = arith.constant 0 : i32
    return %arg0, %c0_i32 : i32, i32
  }
}

</mosaic_0001>

<llo_original>
// kernel: tpu_custom_call.1
$region0: #{tpu_custom_call.1}
  #allocation0 [shape = 'u32[]', space=smem, size = 0x4, offset = 0x4, fixed_abs, tag = 'smem constant byte address 0x4 - core index']
  #allocation1 [shape = 'u32[144,128]{1,0:T(1,128)}', space=vmem, size = 0x12000, scoped, tag = 'internal scratch']
  #allocation2 [shape = 'f32[8,32]{1,0:T(8,128)}', space=vmem, size = 0x1000, scoped, tag = 'scratch operand']
  #allocation3 [shape = 'f32[8,32]{1,0:T(8,128)}', space=vmem, size = 0x1000, scoped, tag = 'scratch operand']
  %s0 = inlined_call_operand.hbm [shape: f32[16,32], index: 0, kind: input, shape index: {}]
  %s1 = inlined_call_operand.hbm [shape: bf16[2,32,48], index: 1, kind: input, shape index: {}]
  %s2 = inlined_call_operand.hbm [shape: bf16[2,16,32], index: 2, kind: input, shape index: {}]
  %s3 = inlined_call_operand.vmem [shape: f32[1,32], index: 3, kind: input, shape index: {}]
  %s4 = inlined_call_operand.vmem [shape: f32[1,32], index: 4, kind: input, shape index: {}]
  %s5 = inlined_call_operand.vmem [shape: f32[1,32], index: 5, kind: input, shape index: {}]
  %s6 = inlined_call_operand.vmem [shape: f32[1,32], index: 6, kind: input, shape index: {}]
  %s7 = inlined_call_operand.hbm [shape: f32[16,32], index: 7, kind: output, shape index: {}]
  %s8 = sld [smem:[#allocation0]]
  $region81: #{tpu_custom_call.1} parent=0
    _
  %s10 = ssub.s32 1, %s8
  %s11 = scalar_select 0, %s10, %s8
  $region1: #{tpu_custom_call.1} parent=0
    #allocation4 [shape = 'u8[8192]{0}', space=vmem, size = 0x2000, scoped, tag = 'input window, operand 0']
    #allocation5 [shape = 's32[2]{0}', space=sflag, size = 0x8, scoped, tag = 'scoped memory for tpu_custom_call.1']
    #allocation6 [shape = 's32[2]{0}', space=sflag, size = 0x8, scoped, tag = 'scoped memory for tpu_custom_call.1']
    #allocation7 [shape = 'u8[16384]{0}', space=vmem, size = 0x4000, scoped, tag = 'input window, operand 1']
    #allocation8 [shape = 's32[2]{0}', space=sflag, size = 0x8, scoped, tag = 'scoped memory for tpu_custom_call.1']
    #allocation9 [shape = 'u8[8192]{0}', space=vmem, size = 0x2000, scoped, tag = 'input window, operand 2']
    #allocation10 [shape = 'u8[8192]{0}', space=vmem, size = 0x2000, scoped, tag = 'output window, operand 0']
    %12 = vsyncpa [#allocation5], 0
    %s13 = scalar_lea.sflag [#allocation5], 1
    %14 = vsyncpa %s13, 0
    %15 = vsyncpa [#allocation8], 0
    %s16 = scalar_lea.sflag [#allocation8], 1
    %17 = vsyncpa %s16, 0
    %18 = vsyncpa [#allocation6], 0
    %s19 = scalar_lea.sflag [#allocation6], 1
    %20 = vsyncpa %s19, 0
    loop: start=0, step=1, limit=6
    $region2: #{tpu_custom_call.1} parent=1 // loop_pre_header
      _
    $region3: #{tpu_custom_call.1} parent=1 // loop_header
      %s22 = sphi 0, %s26
      %p23 = scmp.ge.s32.totalorder %s22, 6
      %s29 = sphi 0, %s41
      %s30 = sphi 0, %s37
      %s31 = sphi 0, %s29
      %s32 = sphi 0, %s30
      %s33 = sphi 0, %s31
      %s34 = sphi 0, %s32
      %s44 = sphi 0, %s46
      %s47 = sphi 0, %s44
      %s48 = sphi 0, %s47
      %s64 = sphi 0, %s48
      %s70 = sphi 0, %s72
      %s73 = sphi 0, %s70
      %s74 = sphi 0, %s73
      %s90 = sphi 0, %s74
      %s96 = sphi 0, %s98
      %s99 = sphi 0, %s96
      %s100 = sphi 0, %s99
      %s116 = sphi 0, %s100
      %s120 = sphi 0, %s120
      %s122 = sphi 0, %s120
      %s123 = sphi 0, %s122
      %s137 = sphi 0, %s123
      %s141 = sphi 0, %s141
      %s143 = sphi 0, %s141
      %s144 = sphi 0, %s143
      %s158 = sphi 0, %s144
      %s162 = sphi 0, %s162
      %s164 = sphi 0, %s162
      %s165 = sphi 0, %s164
      %s179 = sphi 0, %s165
      %s183 = sphi 0, %s183
      %s185 = sphi 0, %s183
      %s186 = sphi 0, %s185
      %s200 = sphi 0, %s186
      %s206 = sphi 0, %s208
      %s209 = sphi 0, %s206
      %s210 = sphi 0, %s209
      %s226 = sphi 0, %s210
    $region4: #{tpu_custom_call.1} parent=1 // loop_header_branch
      %25 = sbr.rel (%p23) target = $region8
    $region5: #{tpu_custom_call.1} parent=1 // loop_body
      %s27 = ssub.s32 %s22, 1
      %s28 = ssub.s32 %s22, 2
      %s35 = sadd.s32 1, %s30
      %p36 = scmp.ge.s32.totalorder %s35, 2
      %s37 = scalar_select %p36, 0, %s35
      %s38 = sadd.s32 1, %s29
      %s39 = scalar_select %p36, %s38, %s29
      %p40 = scmp.ge.s32.totalorder %s39, 2
      %s41 = scalar_select %p40, 0, %s39
      %s42 = ssub.s32 %s29, %s41
      %p43 = scmp.eq.s32.totalorder %s42, 0
      %s45 = sadd.s32 %s44, 1
      %s46 = scalar_select %p43, %s44, %s45
      %p49 = pneg %p43
      %p50 = scmp.eq.s32.totalorder %s22, 3
      %p51 = por %p49, %p50
      %p52 = scmp.ne.s32.totalorder %s44, %s47
      %p53 = scmp.eq.s32.totalorder %s22, 0
      %p54 = por %p52, %p53
      %p55 = scmp.ne.s32.totalorder %s44, %s47
      %p56 = scmp.eq.s32.totalorder %s27, 3
      %p57 = por %p55, %p56
      %p58 = scmp.ne.s32.totalorder %s47, %s48
      %p59 = scmp.eq.s32.totalorder %s27, 0
      %p60 = por %p58, %p59
      %p61 = scmp.ne.s32.totalorder %s47, %s48
      %p62 = scmp.eq.s32.totalorder %s28, 3
      %p63 = por %p61, %p62
      %p65 = scmp.ne.s32.totalorder %s48, %s64
      %p66 = scmp.eq.s32.totalorder %s28, 0
      %p67 = por %p65, %p66
      %s68 = ssub.s32 %s30, %s37
      %p69 = scmp.eq.s32.totalorder %s68, 0
      %s71 = sadd.s32 %s70, 1
      %s72 = scalar_select %p69, %s70, %s71
      %p75 = pneg %p69
      %p76 = scmp.eq.s32.totalorder %s22, 3
      %p77 = por %p75, %p76
      %p78 = scmp.ne.s32.totalorder %s70, %s73
      %p79 = scmp.eq.s32.totalorder %s22, 0
      %p80 = por %p78, %p79
      %p81 = scmp.ne.s32.totalorder %s70, %s73
      %p82 = scmp.eq.s32.totalorder %s27, 3
      %p83 = por %p81, %p82
      %p84 = scmp.ne.s32.totalorder %s73, %s74
      %p85 = scmp.eq.s32.totalorder %s27, 0
      %p86 = por %p84, %p85
      %p87 = scmp.ne.s32.totalorder %s73, %s74
      %p88 = scmp.eq.s32.totalorder %s28, 3
      %p89 = por %p87, %p88
      %p91 = scmp.ne.s32.totalorder %s74, %s90
      %p92 = scmp.eq.s32.totalorder %s28, 0
      %p93 = por %p91, %p92
      %s94 = ssub.s32 %s30, %s37
      %p95 = scmp.eq.s32.totalorder %s94, 0
      %s97 = sadd.s32 %s96, 1
      %s98 = scalar_select %p95, %s96, %s97
      %p101 = pneg %p95
      %p102 = scmp.eq.s32.totalorder %s22, 3
      %p103 = por %p101, %p102
      %p104 = scmp.ne.s32.totalorder %s96, %s99
      %p105 = scmp.eq.s32.totalorder %s22, 0
      %p106 = por %p104, %p105
      %p107 = scmp.ne.s32.totalorder %s96, %s99
      %p108 = scmp.eq.s32.totalorder %s27, 3
      %p109 = por %p107, %p108
      %p110 = scmp.ne.s32.totalorder %s99, %s100
      %p111 = scmp.eq.s32.totalorder %s27, 0
      %p112 = por %p110, %p111
      %p113 = scmp.ne.s32.totalorder %s99, %s100
      %p114 = scmp.eq.s32.totalorder %s28, 3
      %p115 = por %p113, %p114
      %p117 = scmp.ne.s32.totalorder %s100, %s116
      %p118 = scmp.eq.s32.totalorder %s28, 0
      %p119 = por %p117, %p118
      %s121 = sadd.s32 %s120, 1
      %p124 = scmp.eq.s32.totalorder %s22, 3
      %p125 = scmp.ne.s32.totalorder %s120, %s122
      %p126 = scmp.eq.s32.totalorder %s22, 0
      %p127 = por %p125, %p126
      %p128 = scmp.ne.s32.totalorder %s120, %s122
      %p129 = scmp.eq.s32.totalorder %s27, 3
      %p130 = por %p128, %p129
      %p131 = scmp.ne.s32.totalorder %s122, %s123
      %p132 = scmp.eq.s32.totalorder %s27, 0
      %p133 = por %p131, %p132
      %p134 = scmp.ne.s32.totalorder %s122, %s123
      %p135 = scmp.eq.s32.totalorder %s28, 3
      %p136 = por %p134, %p135
      %p138 = scmp.ne.s32.totalorder %s123, %s137
      %p139 = scmp.eq.s32.totalorder %s28, 0
      %p140 = por %p138, %p139
      %s142 = sadd.s32 %s141, 1
      %p145 = scmp.eq.s32.totalorder %s22, 3
      %p146 = scmp.ne.s32.totalorder %s141, %s143
      %p147 = scmp.eq.s32.totalorder %s22, 0
      %p148 = por %p146, %p147
      %p149 = scmp.ne.s32.totalorder %s141, %s143
      %p150 = scmp.eq.s32.totalorder %s27, 3
      %p151 = por %p149, %p150
      %p152 = scmp.ne.s32.totalorder %s143, %s144
      %p153 = scmp.eq.s32.totalorder %s27, 0
      %p154 = por %p152, %p153
      %p155 = scmp.ne.s32.totalorder %s143, %s144
      %p156 = scmp.eq.s32.totalorder %s28, 3
      %p157 = por %p155, %p156
      %p159 = scmp.ne.s32.totalorder %s144, %s158
      %p160 = scmp.eq.s32.totalorder %s28, 0
      %p161 = por %p159, %p160
      %s163 = sadd.s32 %s162, 1
      %p166 = scmp.eq.s32.totalorder %s22, 3
      %p167 = scmp.ne.s32.totalorder %s162, %s164
      %p168 = scmp.eq.s32.totalorder %s22, 0
      %p169 = por %p167, %p168
      %p170 = scmp.ne.s32.totalorder %s162, %s164
      %p171 = scmp.eq.s32.totalorder %s27, 3
      %p172 = por %p170, %p171
      %p173 = scmp.ne.s32.totalorder %s164, %s165
      %p174 = scmp.eq.s32.totalorder %s27, 0
      %p175 = por %p173, %p174
      %p176 = scmp.ne.s32.totalorder %s164, %s165
      %p177 = scmp.eq.s32.totalorder %s28, 3
      %p178 = por %p176, %p177
      %p180 = scmp.ne.s32.totalorder %s165, %s179
      %p181 = scmp.eq.s32.totalorder %s28, 0
      %p182 = por %p180, %p181
      %s184 = sadd.s32 %s183, 1
      %p187 = scmp.eq.s32.totalorder %s22, 3
      %p188 = scmp.ne.s32.totalorder %s183, %s185
      %p189 = scmp.eq.s32.totalorder %s22, 0
      %p190 = por %p188, %p189
      %p191 = scmp.ne.s32.totalorder %s183, %s185
      %p192 = scmp.eq.s32.totalorder %s27, 3
      %p193 = por %p191, %p192
      %p194 = scmp.ne.s32.totalorder %s185, %s186
      %p195 = scmp.eq.s32.totalorder %s27, 0
      %p196 = por %p194, %p195
      %p197 = scmp.ne.s32.totalorder %s185, %s186
      %p198 = scmp.eq.s32.totalorder %s28, 3
      %p199 = por %p197, %p198
      %p201 = scmp.ne.s32.totalorder %s186, %s200
      %p202 = scmp.eq.s32.totalorder %s28, 0
      %p203 = por %p201, %p202
      %s204 = ssub.s32 %s29, %s41
      %p205 = scmp.eq.s32.totalorder %s204, 0
      %s207 = sadd.s32 %s206, 1
      %s208 = scalar_select %p205, %s206, %s207
      %p211 = pneg %p205
      %p212 = scmp.eq.s32.totalorder %s22, 3
      %p213 = por %p211, %p212
      %p214 = scmp.ne.s32.totalorder %s206, %s209
      %p215 = scmp.eq.s32.totalorder %s22, 0
      %p216 = por %p214, %p215
      %p217 = scmp.ne.s32.totalorder %s206, %s209
      %p218 = scmp.eq.s32.totalorder %s27, 3
      %p219 = por %p217, %p218
      %p220 = scmp.ne.s32.totalorder %s209, %s210
      %p221 = scmp.eq.s32.totalorder %s27, 0
      %p222 = por %p220, %p221
      %p223 = scmp.ne.s32.totalorder %s209, %s210
      %p224 = scmp.eq.s32.totalorder %s28, 3
      %p225 = por %p223, %p224
      %p227 = scmp.ne.s32.totalorder %s210, %s226
      %p228 = scmp.eq.s32.totalorder %s28, 0
      %p229 = por %p227, %p228
      %p230 = scmp.le.s32.totalorder 1, %s22
      %p231 = scmp.lt.s32.totalorder %s22, 5
      %p232 = pnand %p230, %p231
      %p233 = pneg %p232
      // Predicated region
      $region9: #{tpu_custom_call.1} parent=5 // pred_check
        _
      $region10: #{tpu_custom_call.1} parent=5 // pred_check_branch
        %235 = sbr.rel (%p232) target = $region12
      $region11: #{tpu_custom_call.1} parent=5 // pred_region
        %s236 = ssub.s32 %s22, 1
        // Predicated region
        $region13: #{tpu_custom_call.1} parent=11 // pred_check
          %p237 = pneg %p133
        $region14: #{tpu_custom_call.1} parent=11 // pred_check_branch
          %239 = sbr.rel (%p237) target = $region16
        $region15: #{tpu_custom_call.1} parent=11 // pred_region
          _
        $region16: #{tpu_custom_call.1} parent=11 // pred_fallthru
          _
        // Predicated region
        $region17: #{tpu_custom_call.1} parent=11 // pred_check
          %p240 = pneg %p154
        $region18: #{tpu_custom_call.1} parent=11 // pred_check_branch
          %242 = sbr.rel (%p240) target = $region20
        $region19: #{tpu_custom_call.1} parent=11 // pred_region
          _
        $region20: #{tpu_custom_call.1} parent=11 // pred_fallthru
          _
        // Predicated region
        $region21: #{tpu_custom_call.1} parent=11 // pred_check
          %p243 = pneg %p175
        $region22: #{tpu_custom_call.1} parent=11 // pred_check_branch
          %245 = sbr.rel (%p243) target = $region24
        $region23: #{tpu_custom_call.1} parent=11 // pred_region
          _
        $region24: #{tpu_custom_call.1} parent=11 // pred_fallthru
          _
        // Predicated region
        $region25: #{tpu_custom_call.1} parent=11 // pred_check
          %p246 = pneg %p196
        $region26: #{tpu_custom_call.1} parent=11 // pred_check_branch
          %248 = sbr.rel (%p246) target = $region28
        $region27: #{tpu_custom_call.1} parent=11 // pred_region
          _
        $region28: #{tpu_custom_call.1} parent=11 // pred_fallthru
          _
      $region12: #{tpu_custom_call.1} parent=5 // pred_fallthru
        _
      %p249 = scmp.lt.s32.totalorder %s22, 4
      // Predicated region
      $region29: #{tpu_custom_call.1} parent=5 // pred_check
        %p250 = pneg %p249
      $region30: #{tpu_custom_call.1} parent=5 // pred_check_branch
        %252 = sbr.rel (%p250) target = $region32
      $region31: #{tpu_custom_call.1} parent=5 // pred_region
        // Predicated region
        $region33: #{tpu_custom_call.1} parent=31 // pred_check
          %p253 = pneg %p54
        $region34: #{tpu_custom_call.1} parent=31 // pred_check_branch
          %255 = sbr.rel (%p253) target = $region36
        $region35: #{tpu_custom_call.1} parent=31 // pred_region
          %s256 = sand.u32 %s44, 1
          %s257 = scalar_lea.sflag [#allocation5], %s256
          %s258 = sand.u32 %s44, 1
          %s259 = smul.addr %s258, 8
          %s260 = scalar_lea.vmem [#allocation4], %s259
          %s262 = ssub.s32 128, 128
          %263 = vsyncadd %s257, %s262
          %s264 = smul.addr %s29, 128
          %s265 = scalar_lea.hbm %s0, %s264
          %s267 = sshll.u32 %s260, 4
          %s268 = int_to_ptr.vmem [resolvable:$true] %s267
          %270 = dma.hbm_to_vmem [thread:$0]  %s265, 128, %s268, %s257
        $region36: #{tpu_custom_call.1} parent=31 // pred_fallthru
          _
        // Predicated region
        $region37: #{tpu_custom_call.1} parent=31 // pred_check
          %p271 = pneg %p80
        $region38: #{tpu_custom_call.1} parent=31 // pred_check_branch
          %273 = sbr.rel (%p271) target = $region40
        $region39: #{tpu_custom_call.1} parent=31 // pred_region
          %s274 = sand.u32 %s22, 1
          %s275 = scalar_lea.sflag [#allocation8], %s274
          %s276 = sand.u32 %s70, 1
          %s277 = smul.addr %s276, 16
          %s278 = scalar_lea.vmem [#allocation7], %s277
          %s280 = ssub.s32 256, 256
          %281 = vsyncadd %s275, %s280
          %s282 = smul.addr %s30, 4
          %s283 = smul.addr %s282, 64
          %s284 = scalar_lea.hbm %s1, %s283
          %s285 = sshll.u32 %s278, 4
          %s286 = int_to_ptr.vmem [resolvable:$true] %s285
          %291 = dma.hbm_to_vmem [thread:$0]  %s284, 256, %s286, %s275, 64, 64, 4
        $region40: #{tpu_custom_call.1} parent=31 // pred_fallthru
          _
        // Predicated region
        $region41: #{tpu_custom_call.1} parent=31 // pred_check
          %p292 = pneg %p106
        $region42: #{tpu_custom_call.1} parent=31 // pred_check_branch
          %294 = sbr.rel (%p292) target = $region44
        $region43: #{tpu_custom_call.1} parent=31 // pred_region
          %s295 = sand.u32 %s22, 1
          %s296 = scalar_lea.sflag [#allocation8], %s295
          %s297 = sand.u32 %s96, 1
          %s298 = smul.addr %s297, 8
          %s299 = scalar_lea.vmem [#allocation9], %s298
          %s301 = ssub.s32 128, 128
          %302 = vsyncadd %s296, %s301
          %s303 = smul.addr %s30, 2
          %s304 = smul.addr %s303, 64
          %s305 = scalar_lea.hbm %s2, %s304
          %s306 = sshll.u32 %s299, 4
          %s307 = int_to_ptr.vmem [resolvable:$true] %s306
          %312 = dma.hbm_to_vmem [thread:$0]  %s305, 128, %s307, %s296, 64, 64, 4
        $region44: #{tpu_custom_call.1} parent=31 // pred_fallthru
          _
      $region32: #{tpu_custom_call.1} parent=5 // pred_fallthru
        _
      %p313 = scmp.le.s32.totalorder 1, %s22
      %p314 = scmp.lt.s32.totalorder %s22, 5
      %p315 = pnand %p313, %p314
      %p316 = pneg %p315
      // Predicated region
      $region45: #{tpu_custom_call.1} parent=5 // pred_check
        _
      $region46: #{tpu_custom_call.1} parent=5 // pred_check_branch
        %318 = sbr.rel (%p315) target = $region48
      $region47: #{tpu_custom_call.1} parent=5 // pred_region
        %s319 = ssub.s32 %s22, 1
        %s320 = sand.u32 %s47, 1
        %s321 = scalar_lea.sflag [#allocation5], %s320
        %s322 = sand.u32 %s47, 1
        %s323 = smul.addr %s322, 8
        %s324 = scalar_lea.vmem [#allocation4], %s323
        // Predicated region
        $region49: #{tpu_custom_call.1} parent=47 // pred_check
          %p325 = pneg %p60
        $region50: #{tpu_custom_call.1} parent=47 // pred_check_branch
          %327 = sbr.rel (%p325) target = $region52
        $region51: #{tpu_custom_call.1} parent=47 // pred_region
          %328 = dma.done %s321, 128
        $region52: #{tpu_custom_call.1} parent=47 // pred_fallthru
          _
        %s329 = sand.u32 %s27, 1
        %s330 = scalar_lea.sflag [#allocation8], %s329
        %s331 = sand.u32 %s73, 1
        %s332 = smul.addr %s331, 16
        %s333 = scalar_lea.vmem [#allocation7], %s332
        // Predicated region
        $region53: #{tpu_custom_call.1} parent=47 // pred_check
          %p334 = pneg %p86
        $region54: #{tpu_custom_call.1} parent=47 // pred_check_branch
          %336 = sbr.rel (%p334) target = $region56
        $region55: #{tpu_custom_call.1} parent=47 // pred_region
          %337 = dma.done %s330, 256
        $region56: #{tpu_custom_call.1} parent=47 // pred_fallthru
          _
        %s338 = sand.u32 %s27, 1
        %s339 = scalar_lea.sflag [#allocation8], %s338
        %s340 = sand.u32 %s99, 1
        %s341 = smul.addr %s340, 8
        %s342 = scalar_lea.vmem [#allocation9], %s341
        // Predicated region
        $region57: #{tpu_custom_call.1} parent=47 // pred_check
          %p343 = pneg %p112
        $region58: #{tpu_custom_call.1} parent=47 // pred_check_branch
          %345 = sbr.rel (%p343) target = $region60
        $region59: #{tpu_custom_call.1} parent=47 // pred_region
          %346 = dma.done %s339, 128
        $region60: #{tpu_custom_call.1} parent=47 // pred_fallthru
          _
        %s347 = sand.u32 %s47, 1
        %s348 = scalar_lea.sflag [#allocation5], %s347
        %s349 = sand.u32 %s47, 1
        %s350 = smul.addr %s349, 8
        %s351 = scalar_lea.vmem [#allocation4], %s350
        %p352 = pneg %p60
        %p353 = pneg %p57
        %s354 = sand.u32 %s27, 1
        %s355 = scalar_lea.sflag [#allocation8], %s354
        %s356 = sand.u32 %s73, 1
        %s357 = smul.addr %s356, 16
        %s358 = scalar_lea.vmem [#allocation7], %s357
        %p359 = pneg %p86
        %p360 = pneg %p83
        %s361 = sand.u32 %s27, 1
        %s362 = scalar_lea.sflag [#allocation8], %s361
        %s363 = sand.u32 %s99, 1
        %s364 = smul.addr %s363, 8
        %s365 = scalar_lea.vmem [#allocation9], %s364
        %p366 = pneg %p112
        %p367 = pneg %p109
        %p368 = pneg %p133
        %p369 = pneg %p130
        %p370 = pneg %p154
        %p371 = pneg %p151
        %p372 = pneg %p175
        %p373 = pneg %p172
        %p374 = pneg %p196
        %p375 = pneg %p193
        %p376 = pneg %p222
        %p377 = pneg %p219
        %s378 = sand.u32 %s209, 1
        %s379 = scalar_lea.sflag [#allocation6], %s378
        %s380 = sand.u32 %s209, 1
        %s381 = smul.addr %s380, 8
        %s382 = scalar_lea.vmem [#allocation10], %s381
        %p384 = scmp.eq.s32.totalorder %s32, 0
        // Predicated region
        $region61: #{tpu_custom_call.1} parent=47 // pred_check
          %p385 = pneg %p384
        $region62: #{tpu_custom_call.1} parent=47 // pred_check_branch
          %387 = sbr.rel (%p385) target = $region64
        $region63: #{tpu_custom_call.1} parent=47 // pred_region
          %v388 = vld [vmem:[%s324] sm:$0xff]
          %v389 = vld [vmem:[%s3] sm:$0x1]
          %v390 = vld [vmem:[%s4] sm:$0x1]
          %vm391 = vcmask 261120
          %v392 = vsel %vm391, %v388, 0.0
          %393 = vadd.xlane.f32.xlu0 %v392
          %v394 = vpop.xlane.xlu0 %393
          %v395 = vrcp.pop 32.0
          %v396 = vmul.f32 %v394, %v395
          %v397 = vsub.f32 %v388, %v396
          %v398 = vmul.f32 %v397, %v397
          %v399 = vsel %vm391, %v398, 0.0
          %400 = vadd.xlane.f32.xlu0 %v399
          %v401 = vpop.xlane.xlu0 %400
          %v402 = vmul.f32 %v401, %v395
          %v403 = vadd.f32 %v402, 1e-06
          %v404 = vrsqrt.pop %v403
          %v405 = vmul.f32 %v397, %v404
          %v407 = vlaneseq
          %v408 = vshrl.u32 %v407, 7
          %v409 = vsub.s32 0, %v408
          %v410 = vrot.slane %v389, %v409
          %v412 = vmul.f32 %v405, %v410
          %v414 = vlaneseq
          %v415 = vshrl.u32 %v414, 7
          %v416 = vsub.s32 0, %v415
          %v417 = vrot.slane %v390, %v416
          %v419 = vadd.f32 %v412, %v417
          %420 = vst.msk [vmem:[#allocation2] sm:$0xff] %vm391, %v419
          %421 = vst.msk [vmem:[#allocation3] sm:$0xff] %vm391, 0.0
        $region64: #{tpu_custom_call.1} parent=47 // pred_fallthru
          _
        %v422 = vld [vmem:[#allocation2] sm:$0xff]
        %v423 = vpack.c.bf16 %v422, %v422
        %v424 = vld [vmem:[%s333] sm:$0xf]
        %v425 = vld [vmem:[%s333 + $0x4] sm:$0xf]
        %v426 = vld [vmem:[%s333 + $0x8] sm:$0xf]
        %v427 = vld [vmem:[%s333 + $0xc] sm:$0xf]
        %v432 = vunpack.c.l.b16 %v424
        %v433 = vunpack.c.l.b16 %v425
        %v434 = vunpack.c.l.b16 %v426
        %v435 = vunpack.c.l.b16 %v427
        %v436 = vpack.c.b16 %v433, %v432
        %v437 = vpack.c.b16 %v435, %v434
        %vm440 = vcmask 261120
        %v442 = vsel %vm440, %v423, 0
        %444 = vmatprep.subr.bf16.mxu0 0
        %445 = vmatpush1.bf16.msra.mxu0 0
        %446 = vmatprep.subr.bf16.mxu0 0
        %447 = vmatpush1.bf16.msra.mxu0 0
        %448 = vmatprep.subr.bf16.mxu0 0
        %449 = vmatpush1.bf16.msra.mxu0 0
        %450 = vmatprep.subr.bf16.mxu0 0
        %451 = vmatpush1.bf16.msra.mxu0 0
        %452 = vmatprep.subr.bf16.mxu0 0
        %453 = vmatpush1.bf16.msra.mxu0 0
        %454 = vmatprep.subr.bf16.mxu0 0
        %455 = vmatpush1.bf16.msra.mxu0 0
        %456 = vmatprep.subr.bf16.mxu0 0
        %457 = vmatpush1.bf16.msra.mxu0 %v437
        %458 = vmatprep.subr.bf16.mxu0 0
        %459 = vmatpush1.bf16.msra.mxu0 %v436
        %460 = vmatprep.subr.bf16.mxu0 0
        %461 = vmatpush2.bf16.msra.mxu0 0
        %462 = vmatprep.subr.bf16.mxu0 0
        %463 = vmatpush2.bf16.msra.mxu0 0
        %464 = vmatprep.subr.bf16.mxu0 0
        %465 = vmatpush2.bf16.msra.mxu0 0
        %466 = vmatprep.subr.bf16.mxu0 0
        %467 = vmatpush2.bf16.msra.mxu0 0
        %468 = vmatprep.subr.bf16.mxu0 0
        %469 = vmatpush2.bf16.msra.mxu0 0
        %470 = vmatprep.subr.bf16.mxu0 0
        %471 = vmatpush2.bf16.msra.mxu0 0
        %472 = vmatprep.subr.bf16.mxu0 0
        %473 = vmatpush2.bf16.msra.mxu0 0
        %474 = vmatprep.subr.bf16.mxu0 0
        %475 = vmatpush2.bf16.msra.mxu0 0
        %476 = vmatprep.mubr.bf16.mxu0 0
        %477 = vmatmul.mubr.bf16.gmra.mxu0 %v442
        %v478 = vpop.f32.mrf.mxu0
        %v479 = vadd.f32 0.0, %v478
        %v480 = vpop.f32.mrf.mxu0
        %v481 = vpop.f32.mrf.mxu0
        %v482 = vpop.f32.mrf.mxu0
        %483 = vdwg.mxu0
        %v484 = vpack.c.bf16 %v479, %v479
        %486 = vrot.lane.b32.xlu0 %v484, 112
        %v487 = vpop.permute.xlu0 %486
        %vm488 = vcmask 130048
        %v490 = vsel %vm488, %v484, 0
        %v493 = vsel %vm488, %v487, 0
        %495 = vmatprep.subr.bf16.mxu0 0
        %496 = vmatpush1.bf16.xpose.msra.mxu0 0
        %497 = vmatprep.subr.bf16.mxu0 0
        %498 = vmatpush1.bf16.xpose.msra.mxu0 0
        %499 = vmatprep.subr.bf16.mxu0 0
        %500 = vmatpush1.bf16.xpose.msra.mxu0 0
        %501 = vmatprep.subr.bf16.mxu0 0
        %502 = vmatpush1.bf16.xpose.msra.mxu0 0
        %503 = vmatprep.subr.bf16.mxu0 0
        %504 = vmatpush1.bf16.xpose.msra.mxu0 0
        %505 = vmatprep.subr.bf16.mxu0 0
        %506 = vmatpush1.bf16.xpose.msra.mxu0 0
        %507 = vmatprep.subr.bf16.mxu0 0
        %508 = vmatpush1.bf16.xpose.msra.mxu0 0
        %509 = vmatprep.subr.bf16.mxu0 0
        %510 = vmatpush1.bf16.xpose.msra.mxu0 %v493
        %511 = vmatprep.subr.bf16.mxu0 0
        %512 = vmatpush2.bf16.xpose.msra.mxu0 0
        %513 = vmatprep.subr.bf16.mxu0 0
        %514 = vmatpush2.bf16.xpose.msra.mxu0 0
        %515 = vmatprep.subr.bf16.mxu0 0
        %516 = vmatpush2.bf16.xpose.msra.mxu0 0
        %517 = vmatprep.subr.bf16.mxu0 0
        %518 = vmatpush2.bf16.xpose.msra.mxu0 0
        %519 = vmatprep.subr.bf16.mxu0 0
        %520 = vmatpush2.bf16.xpose.msra.mxu0 0
        %521 = vmatprep.subr.bf16.mxu0 0
        %522 = vmatpush2.bf16.xpose.msra.mxu0 0
        %523 = vmatprep.subr.bf16.mxu0 0
        %524 = vmatpush2.bf16.xpose.msra.mxu0 0
        %525 = vmatprep.subr.bf16.mxu0 0
        %526 = vmatpush2.bf16.xpose.msra.mxu0 0
        %527 = vmatprep.mubr.bf16.mxu0 0
        %528 = vmatmul.mubr.bf16.gmra.mxu0 %v490
        %v529 = vpop.f32.mrf.mxu0
        %v530 = vadd.f32 0.0, %v529
        %v531 = vpop.f32.mrf.mxu0
        %v532 = vpop.f32.mrf.mxu0
        %v533 = vpop.f32.mrf.mxu0
        %534 = vdwg.mxu0
        %vm535 = vcmask 64512
        %v536 = vsel %vm535, %v530, -inf
        %537 = vmax.xlane.f32.xlu0 %v536
        %v538 = vpop.xlane.xlu0 %537
        %v539 = vsub.f32 %v530, %v538
        %v540 = vmul.f32 %v539, 1.442695
        %v541 = vpow.pop %v540
        %v542 = vsel %vm535, %v541, 0.0
        %543 = vadd.xlane.f32.xlu0 %v542
        %v544 = vpop.xlane.xlu0 %543
        %v545 = vrcp.pop %v544
        %v546 = vmul.f32 %v541, %v545
        %v547 = vpack.c.bf16 %v546, %v546
        %548 = vrot.lane.b32.xlu0 %v484, 96
        %v549 = vpop.permute.xlu0 %548
        %v551 = vsel %vm535, %v547, 0
        %vm553 = vcmask 1043456
        %v555 = vsel %vm553, %v549, 0
        %557 = vmatprep.subr.bf16.mxu0 0
        %558 = vmatpush1.bf16.msra.mxu0 0
        %559 = vmatprep.subr.bf16.mxu0 0
        %560 = vmatpush1.bf16.msra.mxu0 0
        %561 = vmatprep.subr.bf16.mxu0 0
        %562 = vmatpush1.bf16.msra.mxu0 0
        %563 = vmatprep.subr.bf16.mxu0 0
        %564 = vmatpush1.bf16.msra.mxu0 0
        %565 = vmatprep.subr.bf16.mxu0 0
        %566 = vmatpush1.bf16.msra.mxu0 0
        %567 = vmatprep.subr.bf16.mxu0 0
        %568 = vmatpush1.bf16.msra.mxu0 0
        %569 = vmatprep.subr.bf16.mxu0 0
        %570 = vmatpush1.bf16.msra.mxu0 0
        %571 = vmatprep.subr.bf16.mxu0 0
        %572 = vmatpush1.bf16.msra.mxu0 %v555
        %573 = vmatprep.subr.bf16.mxu0 0
        %574 = vmatpush2.bf16.msra.mxu0 0
        %575 = vmatprep.subr.bf16.mxu0 0
        %576 = vmatpush2.bf16.msra.mxu0 0
        %577 = vmatprep.subr.bf16.mxu0 0
        %578 = vmatpush2.bf16.msra.mxu0 0
        %579 = vmatprep.subr.bf16.mxu0 0
        %580 = vmatpush2.bf16.msra.mxu0 0
        %581 = vmatprep.subr.bf16.mxu0 0
        %582 = vmatpush2.bf16.msra.mxu0 0
        %583 = vmatprep.subr.bf16.mxu0 0
        %584 = vmatpush2.bf16.msra.mxu0 0
        %585 = vmatprep.subr.bf16.mxu0 0
        %586 = vmatpush2.bf16.msra.mxu0 0
        %587 = vmatprep.subr.bf16.mxu0 0
        %588 = vmatpush2.bf16.msra.mxu0 0
        %589 = vmatprep.mubr.bf16.mxu0 0
        %590 = vmatmul.mubr.bf16.gmra.mxu0 %v551
        %v591 = vpop.f32.mrf.mxu0
        %v592 = vadd.f32 0.0, %v591
        %v593 = vpop.f32.mrf.mxu0
        %v594 = vpop.f32.mrf.mxu0
        %v595 = vpop.f32.mrf.mxu0
        %596 = vdwg.mxu0
        %v597 = vld [vmem:[#allocation3] sm:$0xff]
        %v598 = vpack.c.bf16 %v592, %v592
        %v599 = vld [vmem:[%s342] sm:$0xf]
        %v600 = vld [vmem:[%s342 + $0x4] sm:$0xf]
        %v603 = vunpack.c.l.b16 %v599
        %v604 = vunpack.c.l.b16 %v600
        %v605 = vpack.c.b16 %v604, %v603
        %v608 = vsel %vm488, %v598, 0
        %610 = vmatprep.subr.bf16.mxu0 0
        %611 = vmatpush1.bf16.msra.mxu0 0
        %612 = vmatprep.subr.bf16.mxu0 0
        %613 = vmatpush1.bf16.msra.mxu0 0
        %614 = vmatprep.subr.bf16.mxu0 0
        %615 = vmatpush1.bf16.msra.mxu0 0
        %616 = vmatprep.subr.bf16.mxu0 0
        %617 = vmatpush1.bf16.msra.mxu0 0
        %618 = vmatprep.subr.bf16.mxu0 0
        %619 = vmatpush1.bf16.msra.mxu0 0
        %620 = vmatprep.subr.bf16.mxu0 0
        %621 = vmatpush1.bf16.msra.mxu0 0
        %622 = vmatprep.subr.bf16.mxu0 0
        %623 = vmatpush1.bf16.msra.mxu0 0
        %624 = vmatprep.subr.bf16.mxu0 0
        %625 = vmatpush1.bf16.msra.mxu0 %v605
        %626 = vmatprep.subr.bf16.mxu0 0
        %627 = vmatpush2.bf16.msra.mxu0 0
        %628 = vmatprep.subr.bf16.mxu0 0
        %629 = vmatpush2.bf16.msra.mxu0 0
        %630 = vmatprep.subr.bf16.mxu0 0
        %631 = vmatpush2.bf16.msra.mxu0 0
        %632 = vmatprep.subr.bf16.mxu0 0
        %633 = vmatpush2.bf16.msra.mxu0 0
        %634 = vmatprep.subr.bf16.mxu0 0
        %635 = vmatpush2.bf16.msra.mxu0 0
        %636 = vmatprep.subr.bf16.mxu0 0
        %637 = vmatpush2.bf16.msra.mxu0 0
        %638 = vmatprep.subr.bf16.mxu0 0
        %639 = vmatpush2.bf16.msra.mxu0 0
        %640 = vmatprep.subr.bf16.mxu0 0
        %641 = vmatpush2.bf16.msra.mxu0 0
        %642 = vmatprep.mubr.bf16.mxu0 0
        %643 = vmatmul.mubr.bf16.gmra.mxu0 %v608
        %v644 = vpop.f32.mrf.mxu0
        %v645 = vadd.f32 0.0, %v644
        %v646 = vpop.f32.mrf.mxu0
        %v647 = vpop.f32.mrf.mxu0
        %v648 = vpop.f32.mrf.mxu0
        %649 = vdwg.mxu0
        %v650 = vadd.f32 %v597, %v645
        %651 = vst.msk [vmem:[#allocation3] sm:$0xff] %vm440, %v650
        %p652 = scmp.eq.s32.totalorder %s32, 1
        // Predicated region
        $region65: #{tpu_custom_call.1} parent=47 // pred_check
          %p653 = pneg %p652
        $region66: #{tpu_custom_call.1} parent=47 // pred_check_branch
          %655 = sbr.rel (%p653) target = $region68
        $region67: #{tpu_custom_call.1} parent=47 // pred_region
          %v656 = vld [vmem:[%s324] sm:$0xff]
          %v657 = vld [vmem:[#allocation3] sm:$0xff]
          %v658 = vadd.f32 %v656, %v657
          %v659 = vld [vmem:[%s5] sm:$0x1]
          %v660 = vld [vmem:[%s6] sm:$0x1]
          %v661 = vsel %vm440, %v658, 0.0
          %662 = vadd.xlane.f32.xlu0 %v661
          %v663 = vpop.xlane.xlu0 %662
          %v664 = vrcp.pop 32.0
          %v665 = vmul.f32 %v663, %v664
          %v666 = vsub.f32 %v658, %v665
          %v667 = vmul.f32 %v666, %v666
          %v668 = vsel %vm440, %v667, 0.0
          %669 = vadd.xlane.f32.xlu0 %v668
          %v670 = vpop.xlane.xlu0 %669
          %v671 = vmul.f32 %v670, %v664
          %v672 = vadd.f32 %v671, 1e-06
          %v673 = vrsqrt.pop %v672
          %v674 = vmul.f32 %v666, %v673
          %v676 = vlaneseq
          %v677 = vshrl.u32 %v676, 7
          %v678 = vsub.s32 0, %v677
          %v679 = vrot.slane %v659, %v678
          %v681 = vmul.f32 %v674, %v679
          %v683 = vlaneseq
          %v684 = vshrl.u32 %v683, 7
          %v685 = vsub.s32 0, %v684
          %v686 = vrot.slane %v660, %v685
          %v688 = vadd.f32 %v681, %v686
          %v689 = vadd.f32 %v658, %v688
          %690 = vst.msk [vmem:[%s382] sm:$0xff] %vm440, %v689
        $region68: #{tpu_custom_call.1} parent=47 // pred_fallthru
          _
        %s691 = sand.u32 %s209, 1
        %s692 = scalar_lea.sflag [#allocation6], %s691
        %s693 = sand.u32 %s209, 1
        %s694 = smul.addr %s693, 8
        %s695 = scalar_lea.vmem [#allocation10], %s694
        // Predicated region
        $region69: #{tpu_custom_call.1} parent=47 // pred_check
          %p696 = pneg %p219
        $region70: #{tpu_custom_call.1} parent=47 // pred_check_branch
          %698 = sbr.rel (%p696) target = $region72
        $region71: #{tpu_custom_call.1} parent=47 // pred_region
          %s700 = ssub.s32 128, 128
          %701 = vsyncadd %s692, %s700
          %s702 = smul.addr %s31, 128
          %s703 = scalar_lea.hbm %s7, %s702
          %s705 = sshll.u32 %s695, 4
          %s706 = int_to_ptr.vmem [resolvable:$true] %s705
          %708 = dma.vmem_to_hbm [thread:$0]  %s706, 128, %s703, %s692
        $region72: #{tpu_custom_call.1} parent=47 // pred_fallthru
          _
      $region48: #{tpu_custom_call.1} parent=5 // pred_fallthru
        _
      %p709 = scmp.le.s32.totalorder 2, %s22
      // Predicated region
      $region73: #{tpu_custom_call.1} parent=5 // pred_check
        %p710 = pneg %p709
      $region74: #{tpu_custom_call.1} parent=5 // pred_check_branch
        %712 = sbr.rel (%p710) target = $region76
      $region75: #{tpu_custom_call.1} parent=5 // pred_region
        %s713 = ssub.s32 %s22, 2
        // Predicated region
        $region77: #{tpu_custom_call.1} parent=75 // pred_check
          %p714 = pneg %p225
        $region78: #{tpu_custom_call.1} parent=75 // pred_check_branch
          %716 = sbr.rel (%p714) target = $region80
        $region79: #{tpu_custom_call.1} parent=75 // pred_region
          %s717 = sand.u32 %s210, 1
          %s718 = scalar_lea.sflag [#allocation6], %s717
          %s719 = sand.u32 %s210, 1
          %s720 = smul.addr %s719, 8
          %s721 = scalar_lea.vmem [#allocation10], %s720
          %722 = dma.done %s718, 128
        $region80: #{tpu_custom_call.1} parent=75 // pred_fallthru
          _
      $region76: #{tpu_custom_call.1} parent=5 // pred_fallthru
        _
    $region6: #{tpu_custom_call.1} parent=1 // loop_footer
      %s26 = sadd.s32 1, %s22
    $region7: #{tpu_custom_call.1} parent=1 // loop_footer_branch
      %21 = sbr.rel target = $region3
    $region8: #{tpu_custom_call.1} parent=1 // loop_exit
      _
    %723 = vsyncpa [#allocation5], 1
    %s724 = scalar_lea.sflag [#allocation5], 1
    %725 = vsyncpa %s724, 1
    %726 = vsyncpa [#allocation8], 1
    %s727 = scalar_lea.sflag [#allocation8], 1
    %728 = vsyncpa %s727, 1
    %729 = vsyncpa [#allocation6], 1
    %s730 = scalar_lea.sflag [#allocation6], 1
    %731 = vsyncpa %s730, 1

</llo_original>
